<compile_context>
chip_gen: v6e
topology: v6e:2x2x1
jax: 0.10.0
libtpu: 0.0.40
codegen_flags: <defaults>
</compile_context>

<pallas_src>
import functools

import jax
import jax.numpy as jnp
from jax.experimental import pallas as pl
from jax.experimental.pallas import tpu as pltpu


IGNORE_LABEL = -1
THRESH = 0.7
MIN_KEPT = 100          # module default is 100000; smaller so the small demo
                        # still exercises the threshold logic
BALANCE_WEIGHTS = (1.0,)


def _round_up(x, m):
    return ((x + m - 1) // m) * m


# ---------------------------------------------------------------------------
# Kernel 1: per-pixel cross-entropy (reduction='none', ignore_index) + prob@tgt
#   logits_ref: (C, T)    tgt_ref / loss_ref / prob_ref: (1, T)
#   Invalid pixels (ignore_label or lanes past HW in the ragged last block)
#   get loss = 0 and prob = +inf.
# ---------------------------------------------------------------------------
def _ce_prob_kernel(logits_ref, tgt_ref, loss_ref, prob_ref, *,
                    ignore_label, hw, tile):
    logits = logits_ref[...].astype(jnp.float32)               # (C, T) upcast in-kernel
    tgt = tgt_ref[...]                                         # (1, T) int32

    # tail mask: lanes >= HW in the last (partial) block hold garbage reads
    pos = pl.program_id(1) * tile + jax.lax.broadcasted_iota(jnp.int32, tgt.shape, 1)
    valid = jnp.logical_and(pos < hw, tgt != ignore_label)
    t = jnp.where(valid, tgt, 0)                               # tmp_target

    # numerically stable softmax along the class (sublane) axis
    m = jnp.max(logits, axis=0, keepdims=True)                 # (1, T)
    ex = jnp.exp(logits - m)                                   # (C, T)
    sumex = jnp.sum(ex, axis=0, keepdims=True)                 # (1, T)

    # gather logit at the target class via one-hot sublane reduction
    # (C <= ~32: XLU reduce is cheap; MXU would be badly underutilized)
    cls = jax.lax.broadcasted_iota(jnp.int32, logits.shape, 0)
    logit_t = jnp.sum(jnp.where(cls == t, logits, 0.0), axis=0, keepdims=True)
    # softmax numerator at the target class via one tiny (1,T) exp on the EUP
    # (replaces a second one-hot select + cross-sublane reduce)
    ex_t = jnp.exp(logit_t - m)                                # (1, T)

    lse = jnp.log(sumex) + m
    # CrossEntropyLoss(reduction='none', ignore_index): 0 at ignored pixels
    loss_ref[...] = jnp.where(valid, lse - logit_t, 0.0)
    # softmax(score)[tmp_target]; +inf at invalid pixels so (prob < thr)
    # subsumes the validity test downstream.  EUP approx reciprocal ~free.
    prob_ref[...] = jnp.where(valid, ex_t * pl.reciprocal(sumex, approx=True),
                              jnp.float32(jnp.inf))


# ---------------------------------------------------------------------------
# Kernel 2: OHEM masked reduction.  Accumulate elementwise into lane-wide
# resident OUTPUT blocks (same block index every grid step -> single HBM
# writeback); threshold is an SMEM scalar; tail lanes masked in-kernel.
# ---------------------------------------------------------------------------
def _ohem_reduce_kernel(thr_ref, loss_ref, prob_ref, sum_ref, cnt_ref, *,
                        total, tile):
    i = pl.program_id(0)

    @pl.when(i == 0)
    def _():
        sum_ref[...] = jnp.zeros_like(sum_ref)
        cnt_ref[...] = jnp.zeros_like(cnt_ref)

    pos = i * tile + jax.lax.broadcasted_iota(jnp.int32, prob_ref.shape, 1)
    keep = jnp.logical_and(prob_ref[...] < thr_ref[0], pos < total)
    sum_ref[...] += jnp.where(keep, loss_ref[...], 0.0)
    cnt_ref[...] += keep.astype(jnp.float32)


def ohem_cross_entropy(score, target, *, ignore_label=IGNORE_LABEL,
                       thresh=THRESH, min_kept=MIN_KEPT, tile_pixels=16384):
    """Equivalent of OhemCrossEntropy._ohem_forward (returns a scalar loss)."""
    N, C, H, W = score.shape
    assert target.shape == (N, H, W)
    min_kept = max(1, min_kept)
    # TODO(synk): F.interpolate (bilinear resize of score to the target spatial
    #             size) is not implemented; spatial sizes must match.
    # TODO(synk): optional per-class `weight=` of CrossEntropyLoss not implemented.

    HW = H * W
    # lane tile: multiple of 128; sweep 8192-16384 on v5e/v6e, 16384-32768 on v7x.
    tile = max(128, (min(tile_pixels, _round_up(HW, 128)) // 128) * 128)
    # keep the double-buffered logits block well inside the default 32 MiB
    # scoped-VMEM limit (no vmem_limit_bytes override -> safe on v7x too).
    max_tile = max(128, ((12 * 1024 * 1024) // (8 * max(C, 1)) // 128) * 128)
    tile = min(tile, max_tile)

    # natural NCHW layout viewed as (N, C, HW): free reshape, no pad, no astype.
    logits = score.reshape(N, C, HW)
    tgt = target.reshape(N, 1, HW)
    if tgt.dtype != jnp.int32:
        tgt = tgt.astype(jnp.int32)

    grid = (N, pl.cdiv(HW, tile))
    loss, prob = pl.pallas_call(
        functools.partial(_ce_prob_kernel, ignore_label=ignore_label,
                          hw=HW, tile=tile),
        out_shape=(jax.ShapeDtypeStruct((N, 1, HW), jnp.float32),
                   jax.ShapeDtypeStruct((N, 1, HW), jnp.float32)),
        grid=grid,
        in_specs=[pl.BlockSpec((None, C, tile), lambda n, i: (n, 0, i)),
                  pl.BlockSpec((None, 1, tile), lambda n, i: (n, 0, i))],
        out_specs=(pl.BlockSpec((None, 1, tile), lambda n, i: (n, 0, i)),
                   pl.BlockSpec((None, 1, tile), lambda n, i: (n, 0, i))),
        compiler_params=pltpu.CompilerParams(
            dimension_semantics=("parallel", "parallel")),
    )(logits, tgt)

    # --- OHEM threshold: k-th smallest prob among valid pixels ----------------
    P = N * HW
    prob_flat = prob.reshape(P)                         # invalid pixels are +inf
    n_valid = jnp.sum(jnp.isfinite(prob_flat).astype(jnp.int32))
    idx = jnp.minimum(jnp.int32(min_kept), n_valid - 1)
    # Early exit: if >= idx+1 valid probs are already <= thresh, PyTorch's
    # max(sorted[idx], thresh) == thresh exactly -> skip top_k at runtime.
    n_le = jnp.sum((prob_flat <= jnp.float32(thresh)).astype(jnp.int32))
    k = int(min(min_kept + 1, P))

    def _exact_kth():
        # TODO(synk): at production min_kept (1e5) replace this top_k with a
        #             histogram / bisection quantile over prob in [0, 1].
        smallest = -jax.lax.top_k(-prob_flat, k)[0]     # k smallest, ascending
        return jnp.maximum(smallest[jnp.clip(idx, 0, k - 1)], jnp.float32(thresh))

    threshold = jax.lax.cond(n_le > idx, lambda: jnp.float32(thresh), _exact_kth)
    thr_arr = jnp.reshape(threshold, (1,)).astype(jnp.float32)

    # --- masked OHEM reduction (Pallas) ----------------------------------------
    # wide lane tile (>=32K lanes/step when P allows) -> not step-overhead-bound.
    tile_r = min(32768, _round_up(P, 128))
    loss2 = loss.reshape(1, P)
    prob2 = prob.reshape(1, P)

    # TODO(synk): on v7x this single 'arbitrary' axis keeps pass 2 on one
    #             TensorCore; per-core partial outputs would ~2x pass-2 BW
    #             (pass 2 is <10% of total HBM traffic, so left sequential).
    sum_vec, cnt_vec = pl.pallas_call(
        functools.partial(_ohem_reduce_kernel, total=P, tile=tile_r),
        out_shape=(jax.ShapeDtypeStruct((1, tile_r), jnp.float32),
                   jax.ShapeDtypeStruct((1, tile_r), jnp.float32)),
        grid=(pl.cdiv(P, tile_r),),
        in_specs=[pl.BlockSpec(memory_space=pltpu.MemorySpace.SMEM),  # threshold
                  pl.BlockSpec((1, tile_r), lambda i: (0, i)),
                  pl.BlockSpec((1, tile_r), lambda i: (0, i))],
        out_specs=(pl.BlockSpec((1, tile_r), lambda i: (0, 0)),
                   pl.BlockSpec((1, tile_r), lambda i: (0, 0))),
        compiler_params=pltpu.CompilerParams(
            dimension_semantics=("arbitrary",)),
    )(thr_arr, loss2, prob2)

    s = jnp.sum(sum_vec)
    c = jnp.sum(cnt_vec)
    # mean over kept pixels (NaN if nothing kept, matching torch .mean() of empty)
    return s / c


def ohem_criterion_forward(score, target, balance_weights=BALANCE_WEIGHTS):
    """OhemCrossEntropy.forward with config.MODEL.NUM_OUTPUTS == 1."""
    scores = [score]
    assert len(balance_weights) == len(scores)
    # functions = [_ce_forward]*(len-1) + [_ohem_forward]  -> only OHEM here
    return sum(w * ohem_cross_entropy(x, target)
               for w, x in zip(balance_weights, scores))


if __name__ == "__main__":
    key = jax.random.PRNGKey(0)
    k_score, k_tgt, k_ign = jax.random.split(key, 3)

    N, C, H, W = 2, 4, 16, 16
    score = jax.random.normal(k_score, (N, C, H, W), dtype=jnp.float32)
    target = jax.random.randint(k_tgt, (N, H, W), 0, C, dtype=jnp.int32)
    # sprinkle some ignore_label pixels
    ignore_mask = jax.random.bernoulli(k_ign, 0.1, (N, H, W))
    target = jnp.where(ignore_mask, jnp.int32(IGNORE_LABEL), target)

    loss = jax.jit(ohem_criterion_forward)(score, target)
    loss = jax.block_until_ready(loss)
    assert jnp.isfinite(loss)
    print("KERNEL_OK")
</pallas_src>

<mosaic_0001>
module attributes {stable_mosaic.version = 11 : i64} {
  func.func @_ce_prob_kernel(%arg0: i32, %arg1: i32, %arg2: memref<1x4x256xf32, #tpu.memory_space<vmem>>, %arg3: memref<1x1x256xi32, #tpu.memory_space<vmem>>, %arg4: memref<1x1x256xf32, #tpu.memory_space<vmem>>, %arg5: memref<1x1x256xf32, #tpu.memory_space<vmem>>) attributes {dimension_semantics = [#tpu.dimension_semantics<parallel>, #tpu.dimension_semantics<parallel>], iteration_bounds = array<i64: 2, 1>, scalar_prefetch = 0 : i64, scratch_operands = 0 : i64, tpu.core_type = #tpu.core_type<tc>, window_params = [{transform_indices = @transform_0, window_bounds = array<i64: 1, 4, 256>}, {transform_indices = @transform_1, window_bounds = array<i64: 1, 1, 256>}, {transform_indices = @transform_2, window_bounds = array<i64: 1, 1, 256>}, {transform_indices = @transform_3, window_bounds = array<i64: 1, 1, 256>}]} {
    %c0 = arith.constant 0 : index
    %c0_0 = arith.constant 0 : index
    %c0_1 = arith.constant 0 : index
    %0 = vector.load %arg2[%c0, %c0_0, %c0_1] : memref<1x4x256xf32, #tpu.memory_space<vmem>>, vector<1x4x256xf32>
    %1 = vector.shape_cast %0 : vector<1x4x256xf32> to vector<4x256xf32>
    %c0_2 = arith.constant 0 : index
    %c0_3 = arith.constant 0 : index
    %c0_4 = arith.constant 0 : index
    %2 = vector.load %arg3[%c0_2, %c0_3, %c0_4] : memref<1x1x256xi32, #tpu.memory_space<vmem>>, vector<1x1x256xi32>
    %3 = vector.shape_cast %2 : vector<1x1x256xi32> to vector<1x256xi32>
    %c256_i32 = arith.constant 256 : i32
    %4 = arith.muli %arg1, %c256_i32 : i32
    %5 = tpu.iota {dimensions = array<i32: 1>} : vector<1x256xi32>
    %6 = vector.broadcast %4 : i32 to vector<1x256xi32>
    %7 = arith.addi %6, %5 : vector<1x256xi32>
    %c256_i32_5 = arith.constant 256 : i32
    %8 = vector.broadcast %c256_i32_5 : i32 to vector<1x256xi32>
    %9 = arith.cmpi slt, %7, %8 : vector<1x256xi32>
    %c-1_i32 = arith.constant -1 : i32
    %10 = vector.broadcast %c-1_i32 : i32 to vector<1x256xi32>
    %11 = arith.cmpi ne, %3, %10 : vector<1x256xi32>
    %12 = arith.andi %9, %11 : vector<1x256xi1>
    %c0_i32 = arith.constant 0 : i32
    %13 = vector.broadcast %c0_i32 : i32 to vector<1x256xi32>
    %14 = arith.select %12, %3, %13 : vector<1x256xi1>, vector<1x256xi32>
    %cst = arith.constant dense<0xFF800000> : vector<256xf32>
    %15 = vector.multi_reduction <maximumf>, %1, %cst [0] : vector<4x256xf32> to vector<256xf32>
    %16 = vector.shape_cast %15 : vector<256xf32> to vector<1x256xf32>
    %17 = vector.broadcast %16 : vector<1x256xf32> to vector<4x256xf32>
    %18 = arith.subf %1, %17 : vector<4x256xf32>
    %19 = math.exp %18 : vector<4x256xf32>
    %cst_6 = arith.constant dense<0.000000e+00> : vector<256xf32>
    %20 = vector.multi_reduction <add>, %19, %cst_6 [0] : vector<4x256xf32> to vector<256xf32>
    %21 = vector.shape_cast %20 : vector<256xf32> to vector<1x256xf32>
    %22 = tpu.iota {dimensions = array<i32: 0>} : vector<4x256xi32>
    %23 = vector.broadcast %14 : vector<1x256xi32> to vector<4x256xi32>
    %24 = arith.cmpi eq, %22, %23 : vector<4x256xi32>
    %cst_7 = arith.constant 0.000000e+00 : f32
    %25 = vector.broadcast %cst_7 : f32 to vector<4x256xf32>
    %26 = arith.select %24, %1, %25 : vector<4x256xi1>, vector<4x256xf32>
    %cst_8 = arith.constant dense<0.000000e+00> : vector<256xf32>
    %27 = vector.multi_reduction <add>, %26, %cst_8 [0] : vector<4x256xf32> to vector<256xf32>
    %28 = vector.shape_cast %27 : vector<256xf32> to vector<1x256xf32>
    %29 = arith.subf %28, %16 : vector<1x256xf32>
    %30 = math.exp %29 : vector<1x256xf32>
    %31 = math.log %21 : vector<1x256xf32>
    %32 = arith.addf %31, %16 : vector<1x256xf32>
    %33 = arith.subf %32, %28 : vector<1x256xf32>
    %cst_9 = arith.constant 0.000000e+00 : f32
    %34 = vector.broadcast %cst_9 : f32 to vector<1x256xf32>
    %35 = arith.select %12, %33, %34 : vector<1x256xi1>, vector<1x256xf32>
    %c0_10 = arith.constant 0 : index
    %c0_11 = arith.constant 0 : index
    %c0_12 = arith.constant 0 : index
    %36 = vector.load %arg4[%c0_10, %c0_11, %c0_12] : memref<1x1x256xf32, #tpu.memory_space<vmem>>, vector<1x1x256xf32>
    %37 = vector.shape_cast %36 : vector<1x1x256xf32> to vector<1x256xf32>
    %38 = vector.shape_cast %35 : vector<1x256xf32> to vector<1x1x256xf32>
    tpu.vector_store %arg4[%c0_10, %c0_11, %c0_12], %38 {strides = array<i32>} : memref<1x1x256xf32, #tpu.memory_space<vmem>>, vector<1x1x256xf32>,
    %39 = tpu.reciprocal %21 {approx = true} : vector<1x256xf32> -> vector<1x256xf32>
    %40 = arith.mulf %30, %39 : vector<1x256xf32>
    %cst_13 = arith.constant 0x7F800000 : f32
    %41 = vector.broadcast %cst_13 : f32 to vector<1x256xf32>
    %42 = arith.select %12, %40, %41 : vector<1x256xi1>, vector<1x256xf32>
    %c0_14 = arith.constant 0 : index
    %c0_15 = arith.constant 0 : index
    %c0_16 = arith.constant 0 : index
    %43 = vector.load %arg5[%c0_14, %c0_15, %c0_16] : memref<1x1x256xf32, #tpu.memory_space<vmem>>, vector<1x1x256xf32>
    %44 = vector.shape_cast %43 : vector<1x1x256xf32> to vector<1x256xf32>
    %45 = vector.shape_cast %42 : vector<1x256xf32> to vector<1x1x256xf32>
    tpu.vector_store %arg5[%c0_14, %c0_15, %c0_16], %45 {strides = array<i32>} : memref<1x1x256xf32, #tpu.memory_space<vmem>>, vector<1x1x256xf32>,
    return
  }
  func.func @transform_0(%arg0: i32, %arg1: i32) -> (i32, i32, i32) {
    %c0_i32 = arith.constant 0 : i32
    %c0_i32_0 = arith.constant 0 : i32
    return %arg0, %c0_i32, %arg1 : i32, i32, i32
  }
  func.func @transform_1(%arg0: i32, %arg1: i32) -> (i32, i32, i32) {
    %c0_i32 = arith.constant 0 : i32
    %c0_i32_0 = arith.constant 0 : i32
    return %arg0, %c0_i32, %arg1 : i32, i32, i32
  }
  func.func @transform_2(%arg0: i32, %arg1: i32) -> (i32, i32, i32) {
    %c0_i32 = arith.constant 0 : i32
    %c0_i32_0 = arith.constant 0 : i32
    return %arg0, %c0_i32, %arg1 : i32, i32, i32
  }
  func.func @transform_3(%arg0: i32, %arg1: i32) -> (i32, i32, i32) {
    %c0_i32 = arith.constant 0 : i32
    %c0_i32_0 = arith.constant 0 : i32
    return %arg0, %c0_i32, %arg1 : i32, i32, i32
  }
}

module attributes {stable_mosaic.version = 11 : i64} {
  func.func @_ohem_reduce_kernel(%arg0: i32, %arg1: memref<1xf32, #tpu.memory_space<smem>>, %arg2: memref<1x512xf32, #tpu.memory_space<vmem>>, %arg3: memref<1x512xf32, #tpu.memory_space<vmem>>, %arg4: memref<1x512xf32, #tpu.memory_space<vmem>>, %arg5: memref<1x512xf32, #tpu.memory_space<vmem>>) attributes {dimension_semantics = [#tpu.dimension_semantics<arbitrary>], iteration_bounds = array<i64: 1>, scalar_prefetch = 0 : i64, scratch_operands = 0 : i64, tpu.core_type = #tpu.core_type<tc>, window_params = [{transform_indices = @transform_0, window_bounds = array<i64: 1>}, {transform_indices = @transform_1, window_bounds = array<i64: 1, 512>}, {transform_indices = @transform_2, window_bounds = array<i64: 1, 512>}, {pipeline_mode = #tpu.pipeline_mode<synchronous>, transform_indices = @transform_3, window_bounds = array<i64: 1, 512>}, {pipeline_mode = #tpu.pipeline_mode<synchronous>, transform_indices = @transform_4, window_bounds = array<i64: 1, 512>}]} {
    %c0_i32 = arith.constant 0 : i32
    %0 = arith.cmpi eq, %arg0, %c0_i32 : i32
    %1 = arith.extui %0 : i1 to i32
    %c0_i32_0 = arith.constant 0 : i32
    %2 = arith.cmpi ne, %1, %c0_i32_0 : i32
    scf.if %2 {
      %cst_14 = arith.constant 0.000000e+00 : f32
      %25 = vector.broadcast %cst_14 : f32 to vector<1x512xf32>
      %c0_15 = arith.constant 0 : index
      %c0_16 = arith.constant 0 : index
      %26 = vector.load %arg4[%c0_15, %c0_16] : memref<1x512xf32, #tpu.memory_space<vmem>>, vector<1x512xf32>
      tpu.vector_store %arg4[%c0_15, %c0_16], %25 {strides = array<i32>} : memref<1x512xf32, #tpu.memory_space<vmem>>, vector<1x512xf32>,
      %cst_17 = arith.constant 0.000000e+00 : f32
      %27 = vector.broadcast %cst_17 : f32 to vector<1x512xf32>
      %c0_18 = arith.constant 0 : index
      %c0_19 = arith.constant 0 : index
      %28 = vector.load %arg5[%c0_18, %c0_19] : memref<1x512xf32, #tpu.memory_space<vmem>>, vector<1x512xf32>
      tpu.vector_store %arg5[%c0_18, %c0_19], %27 {strides = array<i32>} : memref<1x512xf32, #tpu.memory_space<vmem>>, vector<1x512xf32>,
    } else {
    }
    %c512_i32 = arith.constant 512 : i32
    %3 = arith.muli %arg0, %c512_i32 : i32
    %4 = tpu.iota {dimensions = array<i32: 1>} : vector<1x512xi32>
    %5 = vector.broadcast %3 : i32 to vector<1x512xi32>
    %6 = arith.addi %5, %4 : vector<1x512xi32>
    %c0 = arith.constant 0 : index
    %c0_1 = arith.constant 0 : index
    %7 = vector.load %arg3[%c0, %c0_1] : memref<1x512xf32, #tpu.memory_space<vmem>>, vector<1x512xf32>
    %c0_2 = arith.constant 0 : index
    %8 = memref.load %arg1[%c0_2] : memref<1xf32, #tpu.memory_space<smem>>
    %9 = vector.broadcast %8 : f32 to vector<1x512xf32>
    %10 = arith.cmpf olt, %7, %9 : vector<1x512xf32>
    %c512_i32_3 = arith.constant 512 : i32
    %11 = vector.broadcast %c512_i32_3 : i32 to vector<1x512xi32>
    %12 = arith.cmpi slt, %6, %11 : vector<1x512xi32>
    %13 = arith.andi %10, %12 : vector<1x512xi1>
    %c0_4 = arith.constant 0 : index
    %c0_5 = arith.constant 0 : index
    %14 = vector.load %arg4[%c0_4, %c0_5] : memref<1x512xf32, #tpu.memory_space<vmem>>, vector<1x512xf32>
    %c0_6 = arith.constant 0 : index
    %c0_7 = arith.constant 0 : index
    %15 = vector.load %arg2[%c0_6, %c0_7] : memref<1x512xf32, #tpu.memory_space<vmem>>, vector<1x512xf32>
    %cst = arith.constant 0.000000e+00 : f32
    %16 = vector.broadcast %cst : f32 to vector<1x512xf32>
    %17 = arith.select %13, %15, %16 : vector<1x512xi1>, vector<1x512xf32>
    %18 = arith.addf %14, %17 : vector<1x512xf32>
    %c0_8 = arith.constant 0 : index
    %c0_9 = arith.constant 0 : index
    %19 = vector.load %arg4[%c0_8, %c0_9] : memref<1x512xf32, #tpu.memory_space<vmem>>, vector<1x512xf32>
    tpu.vector_store %arg4[%c0_8, %c0_9], %18 {strides = array<i32>} : memref<1x512xf32, #tpu.memory_space<vmem>>, vector<1x512xf32>,
    %c0_10 = arith.constant 0 : index
    %c0_11 = arith.constant 0 : index
    %20 = vector.load %arg5[%c0_10, %c0_11] : memref<1x512xf32, #tpu.memory_space<vmem>>, vector<1x512xf32>
    %21 = arith.extui %13 : vector<1x512xi1> to vector<1x512xi32>
    %22 = arith.sitofp %21 : vector<1x512xi32> to vector<1x512xf32>
    %23 = arith.addf %20, %22 : vector<1x512xf32>
    %c0_12 = arith.constant 0 : index
    %c0_13 = arith.constant 0 : index
    %24 = vector.load %arg5[%c0_12, %c0_13] : memref<1x512xf32, #tpu.memory_space<vmem>>, vector<1x512xf32>
    tpu.vector_store %arg5[%c0_12, %c0_13], %23 {strides = array<i32>} : memref<1x512xf32, #tpu.memory_space<vmem>>, vector<1x512xf32>,
    return
  }
  func.func @transform_0(%arg0: i32) -> i32 {
    %c0_i32 = arith.constant 0 : i32
    %c0_i32_0 = arith.constant 0 : i32
    return %c0_i32 : i32
  }
  func.func @transform_1(%arg0: i32) -> (i32, i32) {
    %c0_i32 = arith.constant 0 : i32
    %c0_i32_0 = arith.constant 0 : i32
    return %c0_i32, %arg0 : i32, i32
  }
  func.func @transform_2(%arg0: i32) -> (i32, i32) {
    %c0_i32 = arith.constant 0 : i32
    %c0_i32_0 = arith.constant 0 : i32
    return %c0_i32, %arg0 : i32, i32
  }
  func.func @transform_3(%arg0: i32) -> (i32, i32) {
    %c0_i32 = arith.constant 0 : i32
    %c0_i32_0 = arith.constant 0 : i32
    %c0_i32_1 = arith.constant 0 : i32
    return %c0_i32, %c0_i32_0 : i32, i32
  }
  func.func @transform_4(%arg0: i32) -> (i32, i32) {
    %c0_i32 = arith.constant 0 : i32
    %c0_i32_0 = arith.constant 0 : i32
    %c0_i32_1 = arith.constant 0 : i32
    return %c0_i32, %c0_i32_0 : i32, i32
  }
}

</mosaic_0001>

<llo_original>
// kernel: neg.0
$region0: #{neg.0}
  #allocation0 [shape = 's32[1]{0}', space=sflag, size = 0x4, scoped, tag = 'scoped memory for neg.0']
  %s0 = inlined_call_operand.vmem [shape: f32[2,1,256], index: 0, kind: input, shape index: {}]
  %s1 = inlined_call_operand.vmem [shape: f32[2,1,256], index: 1, kind: output, shape index: {}]
  %v2 = vld [vmem:[%s0] sm:$0x1]
  %3 = xla_tuple %v2
  %4 = xla_tuple %3
  %v5 = vxor.u32 %v2, 2147483648
  %6 = xla_tuple %v5
  %7 = vst [vmem:[%s1] sm:$0x1] %v5
  %s8 = scalar_lea.vmem %s0, 2
  %v9 = vld [vmem:[%s8] sm:$0x1]
  %10 = xla_tuple %v9
  %11 = xla_tuple %10
  %v12 = vxor.u32 %v9, 2147483648
  %13 = xla_tuple %v12
  %s14 = scalar_lea.vmem %s1, 2
  %15 = vst [vmem:[%s14] sm:$0x1] %v12
  %s16 = scalar_lea.vmem %s0, 1
  %v17 = vld [vmem:[%s16] sm:$0x1]
  %18 = xla_tuple %v17
  %19 = xla_tuple %18
  %v20 = vxor.u32 %v17, 2147483648
  %21 = xla_tuple %v20
  %s22 = scalar_lea.vmem %s1, 1
  %23 = vst [vmem:[%s22] sm:$0x1] %v20
  %s24 = scalar_lea.vmem %s0, 3
  %v25 = vld [vmem:[%s24] sm:$0x1]
  %26 = xla_tuple %v25
  %27 = xla_tuple %26
  %v28 = vxor.u32 %v25, 2147483648
  %29 = xla_tuple %v28
  %s30 = scalar_lea.vmem %s1, 3
  %31 = vst [vmem:[%s30] sm:$0x1] %v28

// kernel: ohem_criterion_forward.2
$region0: #{ohem_criterion_forward.2}
  #allocation0 [shape = 'u32[]', space=smem, size = 0x4, offset = 0x4, fixed_abs, tag = 'smem constant byte address 0x4 - core index']
  #allocation1 [shape = 'u32[144,128]{1,0:T(1,128)}', space=vmem, size = 0x12000, scoped, tag = 'internal scratch']
  %s0 = inlined_call_operand.vmem [shape: f32[2,4,256], index: 0, kind: input, shape index: {}]
  %s1 = inlined_call_operand.vmem [shape: s32[2,1,256], index: 1, kind: input, shape index: {}]
  %s2 = inlined_call_operand.vmem [shape: f32[2,1,256], index: 2, kind: output, shape index: {0}]
  %s3 = inlined_call_operand.vmem [shape: f32[2,1,256], index: 3, kind: output, shape index: {1}]
  %4 = xla_tuple %s2, %s3
  %s5 = sld [smem:[#allocation0]]
  $region49: #{ohem_criterion_forward.2} parent=0
    _
  %s7 = ssub.s32 1, %s5
  %s8 = scalar_select 0, %s7, %s5
  loop: start=0, step=1, limit=4
  $region2: #{ohem_criterion_forward.2} parent=0 // loop_pre_header
    _
  $region3: #{ohem_criterion_forward.2} parent=0 // loop_header
    %s10 = sphi 0, %s14
    %p11 = scmp.ge.s32.totalorder %s10, 4
    %s17 = sphi 0, %s29
    %s18 = sphi 0, %s25
    %s19 = sphi 0, %s17
    %s20 = sphi 0, %s18
    %s21 = sphi 0, %s19
    %s22 = sphi 0, %s20
    %s34 = sphi 0, %s36
    %s37 = sphi 0, %s34
    %s38 = sphi 0, %s37
    %s54 = sphi 0, %s38
    %s62 = sphi 0, %s64
    %s65 = sphi 0, %s62
    %s66 = sphi 0, %s65
    %s82 = sphi 0, %s66
    %s90 = sphi 0, %s92
    %s93 = sphi 0, %s90
    %s94 = sphi 0, %s93
    %s110 = sphi 0, %s94
    %s118 = sphi 0, %s120
    %s121 = sphi 0, %s118
    %s122 = sphi 0, %s121
    %s138 = sphi 0, %s122
  $region4: #{ohem_criterion_forward.2} parent=0 // loop_header_branch
    %13 = sbr.rel (%p11) target = $region8
  $region5: #{ohem_criterion_forward.2} parent=0 // loop_body
    %s15 = ssub.s32 %s10, 1
    %s16 = ssub.s32 %s10, 2
    %s23 = sadd.s32 1, %s18
    %p24 = scmp.ge.s32.totalorder %s23, 1
    %s25 = scalar_select %p24, 0, %s23
    %s26 = sadd.s32 1, %s17
    %s27 = scalar_select %p24, %s26, %s17
    %p28 = scmp.ge.s32.totalorder %s27, 2
    %s29 = scalar_select %p28, 0, %s27
    %s30 = ssub.s32 %s17, %s29
    %s31 = ssub.s32 %s18, %s25
    %s32 = sor.u32 %s30, %s31
    %p33 = scmp.eq.s32.totalorder %s32, 0
    %s35 = sadd.s32 %s34, 1
    %s36 = scalar_select %p33, %s34, %s35
    %p39 = pneg %p33
    %p40 = scmp.eq.s32.totalorder %s10, 1
    %p41 = por %p39, %p40
    %p42 = scmp.ne.s32.totalorder %s34, %s37
    %p43 = scmp.eq.s32.totalorder %s10, 0
    %p44 = por %p42, %p43
    %p45 = scmp.ne.s32.totalorder %s34, %s37
    %p46 = scmp.eq.s32.totalorder %s15, 1
    %p47 = por %p45, %p46
    %p48 = scmp.ne.s32.totalorder %s37, %s38
    %p49 = scmp.eq.s32.totalorder %s15, 0
    %p50 = por %p48, %p49
    %p51 = scmp.ne.s32.totalorder %s37, %s38
    %p52 = scmp.eq.s32.totalorder %s16, 1
    %p53 = por %p51, %p52
    %p55 = scmp.ne.s32.totalorder %s38, %s54
    %p56 = scmp.eq.s32.totalorder %s16, 0
    %p57 = por %p55, %p56
    %s58 = ssub.s32 %s17, %s29
    %s59 = ssub.s32 %s18, %s25
    %s60 = sor.u32 %s58, %s59
    %p61 = scmp.eq.s32.totalorder %s60, 0
    %s63 = sadd.s32 %s62, 1
    %s64 = scalar_select %p61, %s62, %s63
    %p67 = pneg %p61
    %p68 = scmp.eq.s32.totalorder %s10, 1
    %p69 = por %p67, %p68
    %p70 = scmp.ne.s32.totalorder %s62, %s65
    %p71 = scmp.eq.s32.totalorder %s10, 0
    %p72 = por %p70, %p71
    %p73 = scmp.ne.s32.totalorder %s62, %s65
    %p74 = scmp.eq.s32.totalorder %s15, 1
    %p75 = por %p73, %p74
    %p76 = scmp.ne.s32.totalorder %s65, %s66
    %p77 = scmp.eq.s32.totalorder %s15, 0
    %p78 = por %p76, %p77
    %p79 = scmp.ne.s32.totalorder %s65, %s66
    %p80 = scmp.eq.s32.totalorder %s16, 1
    %p81 = por %p79, %p80
    %p83 = scmp.ne.s32.totalorder %s66, %s82
    %p84 = scmp.eq.s32.totalorder %s16, 0
    %p85 = por %p83, %p84
    %s86 = ssub.s32 %s17, %s29
    %s87 = ssub.s32 %s18, %s25
    %s88 = sor.u32 %s86, %s87
    %p89 = scmp.eq.s32.totalorder %s88, 0
    %s91 = sadd.s32 %s90, 1
    %s92 = scalar_select %p89, %s90, %s91
    %p95 = pneg %p89
    %p96 = scmp.eq.s32.totalorder %s10, 1
    %p97 = por %p95, %p96
    %p98 = scmp.ne.s32.totalorder %s90, %s93
    %p99 = scmp.eq.s32.totalorder %s10, 0
    %p100 = por %p98, %p99
    %p101 = scmp.ne.s32.totalorder %s90, %s93
    %p102 = scmp.eq.s32.totalorder %s15, 1
    %p103 = por %p101, %p102
    %p104 = scmp.ne.s32.totalorder %s93, %s94
    %p105 = scmp.eq.s32.totalorder %s15, 0
    %p106 = por %p104, %p105
    %p107 = scmp.ne.s32.totalorder %s93, %s94
    %p108 = scmp.eq.s32.totalorder %s16, 1
    %p109 = por %p107, %p108
    %p111 = scmp.ne.s32.totalorder %s94, %s110
    %p112 = scmp.eq.s32.totalorder %s16, 0
    %p113 = por %p111, %p112
    %s114 = ssub.s32 %s17, %s29
    %s115 = ssub.s32 %s18, %s25
    %s116 = sor.u32 %s114, %s115
    %p117 = scmp.eq.s32.totalorder %s116, 0
    %s119 = sadd.s32 %s118, 1
    %s120 = scalar_select %p117, %s118, %s119
    %p123 = pneg %p117
    %p124 = scmp.eq.s32.totalorder %s10, 1
    %p125 = por %p123, %p124
    %p126 = scmp.ne.s32.totalorder %s118, %s121
    %p127 = scmp.eq.s32.totalorder %s10, 0
    %p128 = por %p126, %p127
    %p129 = scmp.ne.s32.totalorder %s118, %s121
    %p130 = scmp.eq.s32.totalorder %s15, 1
    %p131 = por %p129, %p130
    %p132 = scmp.ne.s32.totalorder %s121, %s122
    %p133 = scmp.eq.s32.totalorder %s15, 0
    %p134 = por %p132, %p133
    %p135 = scmp.ne.s32.totalorder %s121, %s122
    %p136 = scmp.eq.s32.totalorder %s16, 1
    %p137 = por %p135, %p136
    %p139 = scmp.ne.s32.totalorder %s122, %s138
    %p140 = scmp.eq.s32.totalorder %s16, 0
    %p141 = por %p139, %p140
    %p142 = scmp.le.s32.totalorder 1, %s10
    %p143 = scmp.lt.s32.totalorder %s10, 3
    %p144 = pnand %p142, %p143
    %p145 = pneg %p144
    // Predicated region
    $region9: #{ohem_criterion_forward.2} parent=5 // pred_check
      _
    $region10: #{ohem_criterion_forward.2} parent=5 // pred_check_branch
      %147 = sbr.rel (%p144) target = $region12
    $region11: #{ohem_criterion_forward.2} parent=5 // pred_region
      %s148 = ssub.s32 %s10, 1
    $region12: #{ohem_criterion_forward.2} parent=5 // pred_fallthru
      _
    %p149 = scmp.lt.s32.totalorder %s10, 2
    // Predicated region
    $region13: #{ohem_criterion_forward.2} parent=5 // pred_check
      %p150 = pneg %p149
    $region14: #{ohem_criterion_forward.2} parent=5 // pred_check_branch
      %152 = sbr.rel (%p150) target = $region16
    $region15: #{ohem_criterion_forward.2} parent=5 // pred_region
      // Predicated region
      $region17: #{ohem_criterion_forward.2} parent=15 // pred_check
        %p153 = pneg %p44
      $region18: #{ohem_criterion_forward.2} parent=15 // pred_check_branch
        %155 = sbr.rel (%p153) target = $region20
      $region19: #{ohem_criterion_forward.2} parent=15 // pred_region
        %s156 = smul.u32 2, %s18
        %p157 = scmp.lt.s32.totalorder %s17, 1
        %s158 = scalar_select %p157, %s17, 1
        %p159 = scmp.lt.s32.totalorder %s156, 1
        %s160 = scalar_select %p159, %s156, 1
        %s161 = smul.addr %s158, 2
        %s162 = sadd.s32 %s160, %s161
        %s163 = smul.addr %s162, 4
        %s164 = scalar_lea.vmem %s0, %s163
        %s165 = smul.u32 2, %s18
      $region20: #{ohem_criterion_forward.2} parent=15 // pred_fallthru
        _
      // Predicated region
      $region21: #{ohem_criterion_forward.2} parent=15 // pred_check
        %p166 = pneg %p72
      $region22: #{ohem_criterion_forward.2} parent=15 // pred_check_branch
        %168 = sbr.rel (%p166) target = $region24
      $region23: #{ohem_criterion_forward.2} parent=15 // pred_region
        %s169 = smul.u32 2, %s18
        %p170 = scmp.lt.s32.totalorder %s17, 1
        %s171 = scalar_select %p170, %s17, 1
        %p172 = scmp.lt.s32.totalorder %s169, 1
        %s173 = scalar_select %p172, %s169, 1
        %s174 = smul.addr %s171, 2
        %s175 = sadd.s32 %s173, %s174
        %s176 = scalar_lea.vmem %s1, %s175
        %s177 = smul.u32 2, %s18
      $region24: #{ohem_criterion_forward.2} parent=15 // pred_fallthru
        _
    $region16: #{ohem_criterion_forward.2} parent=5 // pred_fallthru
      _
    %p178 = scmp.le.s32.totalorder 1, %s10
    %p179 = scmp.lt.s32.totalorder %s10, 3
    %p180 = pnand %p178, %p179
    %p181 = pneg %p180
    // Predicated region
    $region25: #{ohem_criterion_forward.2} parent=5 // pred_check
      _
    $region26: #{ohem_criterion_forward.2} parent=5 // pred_check_branch
      %183 = sbr.rel (%p180) target = $region28
    $region27: #{ohem_criterion_forward.2} parent=5 // pred_region
      %s184 = ssub.s32 %s10, 1
      %s185 = smul.u32 2, %s20
      %p186 = scmp.lt.s32.totalorder %s19, 1
      %s187 = scalar_select %p186, %s19, 1
      %p188 = scmp.lt.s32.totalorder %s185, 1
      %s189 = scalar_select %p188, %s185, 1
      %s190 = smul.addr %s187, 2
      %s191 = sadd.s32 %s189, %s190
      %s192 = smul.addr %s191, 4
      %s193 = scalar_lea.vmem %s0, %s192
      %p194 = pneg %p50
      %p195 = pneg %p47
      %s196 = smul.u32 2, %s20
      %p197 = scmp.lt.s32.totalorder %s19, 1
      %s198 = scalar_select %p197, %s19, 1
      %p199 = scmp.lt.s32.totalorder %s196, 1
      %s200 = scalar_select %p199, %s196, 1
      %s201 = smul.addr %s198, 2
      %s202 = sadd.s32 %s200, %s201
      %s203 = scalar_lea.vmem %s1, %s202
      %p204 = pneg %p78
      %p205 = pneg %p75
      %p206 = pneg %p106
      %p207 = pneg %p103
      %s208 = smul.u32 2, %s20
      %p209 = scmp.lt.s32.totalorder %s19, 1
      %s210 = scalar_select %p209, %s19, 1
      %p211 = scmp.lt.s32.totalorder %s208, 1
      %s212 = scalar_select %p211, %s208, 1
      %s213 = smul.addr %s210, 2
      %s214 = sadd.s32 %s212, %s213
      %s215 = scalar_lea.vmem %s2, %s214
      %p216 = pneg %p134
      %p217 = pneg %p131
      %s218 = smul.u32 2, %s20
      %p219 = scmp.lt.s32.totalorder %s19, 1
      %s220 = scalar_select %p219, %s19, 1
      %p221 = scmp.lt.s32.totalorder %s218, 1
      %s222 = scalar_select %p221, %s218, 1
      %s223 = smul.addr %s220, 2
      %s224 = sadd.s32 %s222, %s223
      %s225 = scalar_lea.vmem %s3, %s224
      %s226 = smul.u32 2, %s20
      %p227 = scmp.lt.s32.totalorder %s19, 1
      %s228 = scalar_select %p227, %s19, 1
      %p229 = scmp.lt.s32.totalorder %s226, 1
      %s230 = scalar_select %p229, %s226, 1
      %s231 = smul.addr %s228, 2
      %s232 = sadd.s32 %s230, %s231
      %s233 = smul.addr %s232, 4
      %s234 = scalar_lea.vmem %s0, %s233
      %s235 = smul.u32 2, %s20
      %s236 = smul.u32 2, %s20
      %p237 = scmp.lt.s32.totalorder %s19, 1
      %s238 = scalar_select %p237, %s19, 1
      %p239 = scmp.lt.s32.totalorder %s236, 1
      %s240 = scalar_select %p239, %s236, 1
      %s241 = smul.addr %s238, 2
      %s242 = sadd.s32 %s240, %s241
      %s243 = scalar_lea.vmem %s1, %s242
      %s244 = smul.u32 2, %s20
      %s245 = smul.u32 2, %s20
      %p246 = scmp.lt.s32.totalorder %s19, 1
      %s247 = scalar_select %p246, %s19, 1
      %p248 = scmp.lt.s32.totalorder %s245, 1
      %s249 = scalar_select %p248, %s245, 1
      %s250 = smul.addr %s247, 2
      %s251 = sadd.s32 %s249, %s250
      %s252 = scalar_lea.vmem %s2, %s251
      %s253 = smul.u32 2, %s20
      %s254 = smul.u32 2, %s20
      %p255 = scmp.lt.s32.totalorder %s19, 1
      %s256 = scalar_select %p255, %s19, 1
      %p257 = scmp.lt.s32.totalorder %s254, 1
      %s258 = scalar_select %p257, %s254, 1
      %s259 = smul.addr %s256, 2
      %s260 = sadd.s32 %s258, %s259
      %s261 = scalar_lea.vmem %s3, %s260
      %s262 = smul.u32 2, %s20
      %v263 = vld [vmem:[%s234] sm:$0xff]
      %v264 = vld [vmem:[%s243] sm:$0x3]
      %s265 = smul.u32 %s20, 256
      %v266 = vlaneseq
      %v267 = vand.u32 %v266, 127
      %v268 = vadd.s32 %v267, 128
      %v269 = vstv %s265
      %v270 = vadd.s32 %v269, %v267
      %v271 = vadd.s32 %v269, %v268
      %vm272 = vcmp.lt.s32.totalorder %v270, 256
      %vm273 = vcmp.lt.s32.totalorder %v271, 256
      %vm274 = vcmp.ne.s32.totalorder %v264, 4294967295
      %v275 = vsel %vm274, 1, 0
      %v276 = vlaneseq
      %v277 = vshrl.u32 %v276, 7
      %v278 = vsub.s32 0, %v277
      %v279 = vrot.slane %v275, %v278
      %v280 = vlaneseq
      %v281 = vshrl.u32 %v280, 7
      %v282 = vsub.s32 1, %v281
      %v283 = vrot.slane %v275, %v282
      %vm284 = vcmp.ne.s32.totalorder %v279, 0
      %vm285 = vcmp.ne.s32.totalorder %v283, 0
      %vm286 = vmand %vm272, %vm284
      %vm287 = vmand %vm273, %vm285
      %v288 = vlaneseq
      %v289 = vshrl.u32 %v288, 7
      %v290 = vsub.s32 0, %v289
      %v291 = vrot.slane %v264, %v290
      %v292 = vlaneseq
      %v293 = vshrl.u32 %v292, 7
      %v294 = vsub.s32 1, %v293
      %v295 = vrot.slane %v264, %v294
      %v296 = vsel %vm286, %v291, 0
      %v297 = vsel %vm287, %v295, 0
      %v299 = vcombine.high %v263, %v263
      %vm301 = vcmask 1043456
      %v302 = vsel %vm301, %v263, -inf
      %v303 = vrot.slane %v302, 4
      %v304 = vmax.f32 %v302, %v303
      %v305 = vrot.slane %v304, 2
      %v306 = vmax.f32 %v304, %v305
      %v307 = vrot.slane %v306, 1
      %v308 = vmax.f32 %v306, %v307
      %v309 = vsel %vm301, %v299, -inf
      %v310 = vrot.slane %v309, 4
      %v311 = vmax.f32 %v309, %v310
      %v312 = vrot.slane %v311, 2
      %v313 = vmax.f32 %v311, %v312
      %v314 = vrot.slane %v313, 1
      %v315 = vmax.f32 %v313, %v314
      %v318 = vcombine.low %v308, %v315
      %v320 = vsub.f32 %v263, %v318
      %v321 = vmul.f32 %v320, 1.442695
      %v322 = vpow.pop %v321
      %v324 = vcombine.high %v322, %v322
      %v326 = vsel %vm301, %v322, 0.0
      %v327 = vrot.slane %v326, 4
      %v328 = vadd.f32 %v326, %v327
      %v329 = vrot.slane %v328, 2
      %v330 = vadd.f32 %v328, %v329
      %v331 = vrot.slane %v330, 1
      %v332 = vadd.f32 %v330, %v331
      %v333 = vsel %vm301, %v324, 0.0
      %v334 = vrot.slane %v333, 4
      %v335 = vadd.f32 %v333, %v334
      %v336 = vrot.slane %v335, 2
      %v337 = vadd.f32 %v335, %v336
      %v338 = vrot.slane %v337, 1
      %v339 = vadd.f32 %v337, %v338
      %v340 = vlaneseq
      %v341 = vshrl.u32 %v340, 7
      %v342 = vlaneseq
      %v343 = vshrl.u32 %v342, 7
      %v344 = vsub.s32 0, %v343
      %v345 = vrot.slane %v296, %v344
      %v346 = vlaneseq
      %v347 = vshrl.u32 %v346, 7
      %v348 = vsub.s32 0, %v347
      %v349 = vrot.slane %v297, %v348
      %vm350 = vcmp.eq.s32.totalorder %v341, %v345
      %vm351 = vcmp.eq.s32.totalorder %v341, %v349
      %v352 = vsel %vm350, %v263, 0.0
      %v353 = vsel %vm351, %v299, 0.0
      %v354 = vsel %vm301, %v352, 0.0
      %v355 = vrot.slane %v354, 4
      %v356 = vadd.f32 %v354, %v355
      %v357 = vrot.slane %v356, 2
      %v358 = vadd.f32 %v356, %v357
      %v359 = vrot.slane %v358, 1
      %v360 = vadd.f32 %v358, %v359
      %v361 = vsel %vm301, %v353, 0.0
      %v362 = vrot.slane %v361, 4
      %v363 = vadd.f32 %v361, %v362
      %v364 = vrot.slane %v363, 2
      %v365 = vadd.f32 %v363, %v364
      %v366 = vrot.slane %v365, 1
      %v367 = vadd.f32 %v365, %v366
      %v368 = vsub.f32 %v360, %v308
      %v369 = vsub.f32 %v367, %v315
      %v370 = vmul.f32 %v368, 1.442695
      %v371 = vpow.pop %v370
      %v372 = vmul.f32 %v369, 1.442695
      %v373 = vpow.pop %v372
      %v374 = vlog2.pop %v332
      %v375 = vmul.f32 %v374, 0.6931472
      %v376 = vlog2.pop %v339
      %v377 = vmul.f32 %v376, 0.6931472
      %v378 = vadd.f32 %v375, %v308
      %v379 = vadd.f32 %v377, %v315
      %v380 = vsub.f32 %v378, %v360
      %v381 = vsub.f32 %v379, %v367
      %v382 = vsel %vm286, %v380, 0.0
      %v383 = vsel %vm287, %v381, 0.0
      %v386 = vcombine.low %v382, %v383
      %v388 = vunpack.c.l.s4 1966171168
      %v389 = vunpack.c.0.s8 %v388
      %v390 = vlaneseq
      %v391 = vshrl.u32 %v390, 7
      %v392 = vsub.s32 %v389, %v391
      %v393 = vrot.slane %v386, %v392
      %v395 = vunpack.c.l.s4 1966171168
      %v396 = vunpack.c.0.s8 %v395
      %v397 = vlaneseq
      %v398 = vshrl.u32 %v397, 7
      %v399 = vsub.s32 %v396, %v398
      %v400 = vrot.slane %v393, %v399
      %v402 = vlaneseq
      %vm403 = vcmp.ge.s32.totalorder %v402, 0
      %vm404 = vcmp.lt.s32.totalorder %v402, 256
      %vm405 = vmand %vm403, %vm404
      %406 = vst.msk [vmem:[%s252] sm:$0x3] %vm405, %v400
      %v407 = vrcp.pop %v332
      %v408 = vrcp.pop %v339
      %v409 = vmul.f32 %v371, %v407
      %v410 = vmul.f32 %v373, %v408
      %v411 = vsel %vm286, %v409, inf
      %v412 = vsel %vm287, %v410, inf
      %v415 = vcombine.low %v411, %v412
      %v417 = vunpack.c.l.s4 1966171168
      %v418 = vunpack.c.0.s8 %v417
      %v419 = vlaneseq
      %v420 = vshrl.u32 %v419, 7
      %v421 = vsub.s32 %v418, %v420
      %v422 = vrot.slane %v415, %v421
      %v424 = vunpack.c.l.s4 1966171168
      %v425 = vunpack.c.0.s8 %v424
      %v426 = vlaneseq
      %v427 = vshrl.u32 %v426, 7
      %v428 = vsub.s32 %v425, %v427
      %v429 = vrot.slane %v422, %v428
      %431 = vst.msk [vmem:[%s261] sm:$0x3] %vm405, %v429
      %s432 = smul.u32 2, %s20
      %p433 = scmp.lt.s32.totalorder %s19, 1
      %s434 = scalar_select %p433, %s19, 1
      %p435 = scmp.lt.s32.totalorder %s432, 1
      %s436 = scalar_select %p435, %s432, 1
      %s437 = smul.addr %s434, 2
      %s438 = sadd.s32 %s436, %s437
      %s439 = scalar_lea.vmem %s2, %s438
      %s440 = smul.u32 2, %s20
      %p441 = scmp.lt.s32.totalorder %s19, 1
      %s442 = scalar_select %p441, %s19, 1
      %p443 = scmp.lt.s32.totalorder %s440, 1
      %s444 = scalar_select %p443, %s440, 1
      %s445 = smul.addr %s442, 2
      %s446 = sadd.s32 %s444, %s445
      %s447 = scalar_lea.vmem %s3, %s446
      // Predicated region
      $region29: #{ohem_criterion_forward.2} parent=27 // pred_check
        %p448 = pneg %p103
      $region30: #{ohem_criterion_forward.2} parent=27 // pred_check_branch
        %450 = sbr.rel (%p448) target = $region32
      $region31: #{ohem_criterion_forward.2} parent=27 // pred_region
        %s451 = smul.u32 2, %s20
      $region32: #{ohem_criterion_forward.2} parent=27 // pred_fallthru
        _
      // Predicated region
      $region33: #{ohem_criterion_forward.2} parent=27 // pred_check
        %p452 = pneg %p131
      $region34: #{ohem_criterion_forward.2} parent=27 // pred_check_branch
        %454 = sbr.rel (%p452) target = $region36
      $region35: #{ohem_criterion_forward.2} parent=27 // pred_region
        %s455 = smul.u32 2, %s20
      $region36: #{ohem_criterion_forward.2} parent=27 // pred_fallthru
        _
    $region28: #{ohem_criterion_forward.2} parent=5 // pred_fallthru
      _
    %p456 = scmp.le.s32.totalorder 2, %s10
    // Predicated region
    $region37: #{ohem_criterion_forward.2} parent=5 // pred_check
      %p457 = pneg %p456
    $region38: #{ohem_criterion_forward.2} parent=5 // pred_check_branch
      %459 = sbr.rel (%p457) target = $region40
    $region39: #{ohem_criterion_forward.2} parent=5 // pred_region
      %s460 = ssub.s32 %s10, 2
      // Predicated region
      $region41: #{ohem_criterion_forward.2} parent=39 // pred_check
        %p461 = pneg %p109
      $region42: #{ohem_criterion_forward.2} parent=39 // pred_check_branch
        %463 = sbr.rel (%p461) target = $region44
      $region43: #{ohem_criterion_forward.2} parent=39 // pred_region
        %s464 = smul.u32 2, %s22
        %p465 = scmp.lt.s32.totalorder %s21, 1
        %s466 = scalar_select %p465, %s21, 1
        %p467 = scmp.lt.s32.totalorder %s464, 1
        %s468 = scalar_select %p467, %s464, 1
        %s469 = smul.addr %s466, 2
        %s470 = sadd.s32 %s468, %s469
        %s471 = scalar_lea.vmem %s2, %s470
      $region44: #{ohem_criterion_forward.2} parent=39 // pred_fallthru
        _
      // Predicated region
      $region45: #{ohem_criterion_forward.2} parent=39 // pred_check
        %p472 = pneg %p137
      $region46: #{ohem_criterion_forward.2} parent=39 // pred_check_branch
        %474 = sbr.rel (%p472) target = $region48
      $region47: #{ohem_criterion_forward.2} parent=39 // pred_region
        %s475 = smul.u32 2, %s22
        %p476 = scmp.lt.s32.totalorder %s21, 1
        %s477 = scalar_select %p476, %s21, 1
        %p478 = scmp.lt.s32.totalorder %s475, 1
        %s479 = scalar_select %p478, %s475, 1
        %s480 = smul.addr %s477, 2
        %s481 = sadd.s32 %s479, %s480
        %s482 = scalar_lea.vmem %s3, %s481
      $region48: #{ohem_criterion_forward.2} parent=39 // pred_fallthru
        _
    $region40: #{ohem_criterion_forward.2} parent=5 // pred_fallthru
      _
  $region6: #{ohem_criterion_forward.2} parent=0 // loop_footer
    %s14 = sadd.s32 1, %s10
  $region7: #{ohem_criterion_forward.2} parent=0 // loop_footer_branch
    %9 = sbr.rel target = $region3
  $region8: #{ohem_criterion_forward.2} parent=0 // loop_exit
    _

// kernel: ohem_criterion_forward.3
$region0: #{ohem_criterion_forward.3}
  #allocation0 [shape = 'u32[]', space=smem, size = 0x4, offset = 0x4, fixed_abs, tag = 'smem constant byte address 0x4 - core index']
  #allocation1 [shape = 'u32[144,128]{1,0:T(1,128)}', space=vmem, size = 0x12000, scoped, tag = 'internal scratch']
  #allocation2 [shape = 'f32[1]{0:T(128)S(6)}', space=smem, size = 0x200, scoped, tag = 'scoped memory for ohem_criterion_forward.3']
  %s0 = inlined_call_operand.<no memory space> [shape: f32[1], index: 0, kind: input, shape index: {}]
  %s1 = inlined_call_operand.vmem [shape: f32[1,512], index: 1, kind: input, shape index: {}]
  %s2 = inlined_call_operand.hbm [shape: f32[1,512], index: 2, kind: input, shape index: {}]
  %s3 = inlined_call_operand.vmem [shape: f32[1,512], index: 3, kind: output, shape index: {0}]
  %s4 = inlined_call_operand.vmem [shape: f32[1,512], index: 4, kind: output, shape index: {1}]
  %5 = xla_tuple %s3, %s4
  %s6 = sld [smem:[#allocation0]]
  $region38: #{ohem_criterion_forward.3} parent=0
    _
  %s8 = ssub.s32 1, %s6
  %s9 = scalar_select 0, %s8, %s6
  %10 = sst [smem:[#allocation2]] %s0
  $region1: #{ohem_criterion_forward.3} parent=0
    #allocation3 [shape = 'u8[2048]{0}', space=vmem, size = 0x800, scoped, tag = 'input window, operand 2, single buffered']
    #allocation4 [shape = 's32[1]{0}', space=sflag, size = 0x4, scoped, tag = 'scoped memory for ohem_criterion_forward.3']
    %11 = vsyncpa [#allocation4], 0
    // Predicated region
    $region2: #{ohem_criterion_forward.3} parent=1 // pred_check
      _
    $region3: #{ohem_criterion_forward.3} parent=1 // pred_check_branch
      %13 = sbr.rel (0) target = $region5
    $region4: #{ohem_criterion_forward.3} parent=1 // pred_region
      _
    $region5: #{ohem_criterion_forward.3} parent=1 // pred_fallthru
      _
    // Predicated region
    $region6: #{ohem_criterion_forward.3} parent=1 // pred_check
      _
    $region7: #{ohem_criterion_forward.3} parent=1 // pred_check_branch
      %15 = sbr.rel (0) target = $region9
    $region8: #{ohem_criterion_forward.3} parent=1 // pred_region
      _
    $region9: #{ohem_criterion_forward.3} parent=1 // pred_fallthru
      _
    // Predicated region
    $region10: #{ohem_criterion_forward.3} parent=1 // pred_check
      _
    $region11: #{ohem_criterion_forward.3} parent=1 // pred_check_branch
      %17 = sbr.rel (0) target = $region13
    $region12: #{ohem_criterion_forward.3} parent=1 // pred_region
      %s19 = ssub.s32 64, 64
      %20 = vsyncadd [#allocation4], %s19
      %s22 = sshll.u32 [#allocation3], 4
      %s23 = int_to_ptr.vmem [resolvable:$true] %s22
      %25 = dma.hbm_to_vmem [thread:$0]  %s2, 64, %s23, [#allocation4]
    $region13: #{ohem_criterion_forward.3} parent=1 // pred_fallthru
      _
    // Predicated region
    $region14: #{ohem_criterion_forward.3} parent=1 // pred_check
      _
    $region15: #{ohem_criterion_forward.3} parent=1 // pred_check_branch
      %27 = sbr.rel (0) target = $region17
    $region16: #{ohem_criterion_forward.3} parent=1 // pred_region
      %28 = dma.done [#allocation4], 64
    $region17: #{ohem_criterion_forward.3} parent=1 // pred_fallthru
      _
    %p29 = scmp.eq.s32.totalorder 0, 0
    // Predicated region
    $region18: #{ohem_criterion_forward.3} parent=1 // pred_check
      %p30 = pneg %p29
    $region19: #{ohem_criterion_forward.3} parent=1 // pred_check_branch
      %32 = sbr.rel (%p30) target = $region21
    $region20: #{ohem_criterion_forward.3} parent=1 // pred_region
      %v33 = vlaneseq
      %vm34 = vcmp.ge.s32.totalorder %v33, 0
      %vm35 = vcmp.lt.s32.totalorder %v33, 512
      %vm36 = vmand %vm34, %vm35
      %37 = vst.msk [vmem:[%s3] sm:$0xf] %vm36, 0.0
      %38 = vst.msk [vmem:[%s4] sm:$0xf] %vm36, 0.0
    $region21: #{ohem_criterion_forward.3} parent=1 // pred_fallthru
      _
    %s39 = smul.u32 0, 512
    %v40 = vlaneseq
    %v41 = vand.u32 %v40, 127
    %v42 = vadd.s32 %v41, 128
    %v43 = vadd.s32 %v41, 256
    %v44 = vadd.s32 %v41, 384
    %v45 = vstv %s39
    %v46 = vadd.s32 %v45, %v41
    %v47 = vadd.s32 %v45, %v42
    %v48 = vadd.s32 %v45, %v43
    %v49 = vadd.s32 %v45, %v44
    %v50 = vld [vmem:[#allocation3] sm:$0xf]
    %s51 = sld [smem:[#allocation2]]
    %v52 = vstv %s51
    %vm53 = vcmp.lt.f32.partialorder %v50, %v52
    %vm54 = vcmp.lt.s32.totalorder %v46, 512
    %vm55 = vcmp.lt.s32.totalorder %v47, 512
    %vm56 = vcmp.lt.s32.totalorder %v48, 512
    %vm57 = vcmp.lt.s32.totalorder %v49, 512
    %v58 = vsel %vm54, 1, 0
    %v59 = vsel %vm55, 1, 0
    %v60 = vsel %vm56, 1, 0
    %v61 = vsel %vm57, 1, 0
    %v62 = vcombine.low %v58, %v59
    %v63 = vcombine.low %v60, %v61
    %v65 = vunpack.c.l.s4 1966171168
    %v66 = vunpack.c.0.s8 %v65
    %v67 = vlaneseq
    %v68 = vshrl.u32 %v67, 7
    %v69 = vsub.s32 %v66, %v68
    %v70 = vrot.slane %v62, %v69
    %v72 = vunpack.c.l.s4 1966171168
    %v73 = vunpack.c.0.s8 %v72
    %v74 = vlaneseq
    %v75 = vshrl.u32 %v74, 7
    %v76 = vsub.s32 %v73, %v75
    %v77 = vrot.slane %v63, %v76
    %v78 = vcombine.low %v70, %v77
    %v80 = vunpack.c.l.s4 1966171168
    %v81 = vunpack.c.0.s8 %v80
    %v82 = vlaneseq
    %v83 = vshrl.u32 %v82, 7
    %v84 = vsub.s32 %v81, %v83
    %v85 = vrot.slane %v78, %v84
    %vm86 = vcmp.ne.s32.totalorder %v85, 0
    %vm87 = vmand %vm53, %vm86
    %v88 = vld [vmem:[%s3] sm:$0xf]
    %v89 = vld [vmem:[%s1] sm:$0xf]
    %v90 = vsel %vm87, %v89, 0.0
    %v91 = vadd.f32 %v88, %v90
    %v92 = vlaneseq
    %vm93 = vcmp.ge.s32.totalorder %v92, 0
    %vm94 = vcmp.lt.s32.totalorder %v92, 512
    %vm95 = vmand %vm93, %vm94
    %96 = vst.msk [vmem:[%s3] sm:$0xf] %vm95, %v91
    %v97 = vld [vmem:[%s4] sm:$0xf]
    %v98 = vsel %vm87, 1, 0
    %v99 = vcvt.s32.f32 %v98
    %v100 = vadd.f32 %v97, %v99
    %101 = vst.msk [vmem:[%s4] sm:$0xf] %vm95, %v100
    // Predicated region
    $region22: #{ohem_criterion_forward.3} parent=1 // pred_check
      _
    $region23: #{ohem_criterion_forward.3} parent=1 // pred_check_branch
      %103 = sbr.rel (0) target = $region25
    $region24: #{ohem_criterion_forward.3} parent=1 // pred_region
      _
    $region25: #{ohem_criterion_forward.3} parent=1 // pred_fallthru
      _
    // Predicated region
    $region26: #{ohem_criterion_forward.3} parent=1 // pred_check
      _
    $region27: #{ohem_criterion_forward.3} parent=1 // pred_check_branch
      %105 = sbr.rel (0) target = $region29
    $region28: #{ohem_criterion_forward.3} parent=1 // pred_region
      _
    $region29: #{ohem_criterion_forward.3} parent=1 // pred_fallthru
      _
    // Predicated region
    $region30: #{ohem_criterion_forward.3} parent=1 // pred_check
      _
    $region31: #{ohem_criterion_forward.3} parent=1 // pred_check_branch
      %107 = sbr.rel (0) target = $region33
    $region32: #{ohem_criterion_forward.3} parent=1 // pred_region
      _
    $region33: #{ohem_criterion_forward.3} parent=1 // pred_fallthru
      _
    // Predicated region
    $region34: #{ohem_criterion_forward.3} parent=1 // pred_check
      _
    $region35: #{ohem_criterion_forward.3} parent=1 // pred_check_branch
      %109 = sbr.rel (0) target = $region37
    $region36: #{ohem_criterion_forward.3} parent=1 // pred_region
      _
    $region37: #{ohem_criterion_forward.3} parent=1 // pred_fallthru
      _
    %110 = vsyncpa [#allocation4], 1

</llo_original>
